<compile_context>
chip_gen: v7x
topology: tpu7x:2x2x1
jax: 0.10.0
libtpu: 0.0.40
codegen_flags: <defaults>
</compile_context>

<pallas_src>
import jax
import jax.numpy as jnp
from jax.experimental import pallas as pl
from jax.experimental.pallas import tpu as pltpu


def _small_mm_vpu(a, b):
    """(n, k) @ (k, m) fully unrolled on the VPU as a sum of outer products.

    Avoids the MXU for tiny, serially-dependent matmuls: each term is a
    lane-broadcast column of `a` times a sublane-broadcast row of `b`,
    i.e. plain VPU multiply/add on data already resident in vregs.
    """
    k_dim = a.shape[-1]
    acc = a[:, 0:1] * b[0:1, :]
    for k in range(1, k_dim):
        acc = acc + a[:, k:k + 1] * b[k:k + 1, :]
    return acc


def fused_mm_kernel(x1_ref, x2_ref, inp_ref, out_ref):
    x1 = x1_ref[...]
    x2 = x2_ref[...]
    inp = inp_ref[...]

    v1 = _small_mm_vpu(x1, inp) + x2      # x1 @ inp + x2
    v2 = _small_mm_vpu(x2, v1)            # x2 @ v1
    out_ref[...] = v2 + inp               # already f32; no astype needed


def model_forward(x1, x2, inp):
    assert x1.shape == x2.shape == inp.shape
    assert x1.dtype == x2.dtype == inp.dtype == jnp.float32
    n, m = x1.shape

    # ~2 matmuls (2*n*m*m flops each) + 2 elementwise adds; 4 small f32
    # arrays of traffic.  Advisory only.
    flops = 2 * (2 * n * m * m) + 2 * (n * m)
    bytes_accessed = 4 * n * m * 4

    vmem_spec = pl.BlockSpec(memory_space=pltpu.MemorySpace.VMEM)
    return pl.pallas_call(
        fused_mm_kernel,
        out_shape=jax.ShapeDtypeStruct((n, m), jnp.float32),
        in_specs=[vmem_spec, vmem_spec, vmem_spec],
        out_specs=vmem_spec,
        cost_estimate=pl.CostEstimate(
            flops=flops, transcendentals=0, bytes_accessed=bytes_accessed),
    )(x1, x2, inp)


if __name__ == "__main__":
    key = jax.random.PRNGKey(0)
    k1, k2, k3 = jax.random.split(key, 3)
    # Shapes match the PyTorch module: three 3x3 float32 matrices.
    x1 = jax.random.normal(k1, (3, 3), dtype=jnp.float32)
    x2 = jax.random.normal(k2, (3, 3), dtype=jnp.float32)
    inp = jax.random.normal(k3, (3, 3), dtype=jnp.float32)

    out = model_forward(x1, x2, inp)
    jax.block_until_ready(out)

    # Reference check in plain JAX.
    v1 = x1 @ inp + x2
    ref = x2 @ v1 + inp
    assert jnp.allclose(out, ref, atol=1e-5, rtol=1e-5), "mismatch vs reference"

    print("KERNEL_OK")
</pallas_src>

<mosaic_0001>
module attributes {stable_mosaic.version = 11 : i64} {
  func.func @fused_mm_kernel(%arg0: memref<3x3xf32, #tpu.memory_space<vmem>>, %arg1: memref<3x3xf32, #tpu.memory_space<vmem>>, %arg2: memref<3x3xf32, #tpu.memory_space<vmem>>, %arg3: memref<3x3xf32, #tpu.memory_space<vmem>>) attributes {dimension_semantics = [], scalar_prefetch = 0 : i64, scratch_operands = 0 : i64, tpu.core_type = #tpu.core_type<tc>} {
    %c0 = arith.constant 0 : index
    %c0_0 = arith.constant 0 : index
    %0 = vector.load %arg0[%c0, %c0_0] : memref<3x3xf32, #tpu.memory_space<vmem>>, vector<3x3xf32>
    %c0_1 = arith.constant 0 : index
    %c0_2 = arith.constant 0 : index
    %1 = vector.load %arg1[%c0_1, %c0_2] : memref<3x3xf32, #tpu.memory_space<vmem>>, vector<3x3xf32>
    %c0_3 = arith.constant 0 : index
    %c0_4 = arith.constant 0 : index
    %2 = vector.load %arg2[%c0_3, %c0_4] : memref<3x3xf32, #tpu.memory_space<vmem>>, vector<3x3xf32>
    %3 = vector.extract_strided_slice %0 {offsets = [0, 0], sizes = [3, 1], strides = [1, 1]} : vector<3x3xf32> to vector<3x1xf32>
    %4 = vector.extract_strided_slice %2 {offsets = [0, 0], sizes = [1, 3], strides = [1, 1]} : vector<3x3xf32> to vector<1x3xf32>
    %5 = vector.broadcast %3 : vector<3x1xf32> to vector<3x3xf32>
    %6 = vector.broadcast %4 : vector<1x3xf32> to vector<3x3xf32>
    %7 = arith.mulf %5, %6 : vector<3x3xf32>
    %8 = vector.extract_strided_slice %0 {offsets = [0, 1], sizes = [3, 1], strides = [1, 1]} : vector<3x3xf32> to vector<3x1xf32>
    %9 = vector.extract_strided_slice %2 {offsets = [1, 0], sizes = [1, 3], strides = [1, 1]} : vector<3x3xf32> to vector<1x3xf32>
    %10 = vector.broadcast %8 : vector<3x1xf32> to vector<3x3xf32>
    %11 = vector.broadcast %9 : vector<1x3xf32> to vector<3x3xf32>
    %12 = arith.mulf %10, %11 : vector<3x3xf32>
    %13 = arith.addf %7, %12 : vector<3x3xf32>
    %14 = vector.extract_strided_slice %0 {offsets = [0, 2], sizes = [3, 1], strides = [1, 1]} : vector<3x3xf32> to vector<3x1xf32>
    %15 = vector.extract_strided_slice %2 {offsets = [2, 0], sizes = [1, 3], strides = [1, 1]} : vector<3x3xf32> to vector<1x3xf32>
    %16 = vector.broadcast %14 : vector<3x1xf32> to vector<3x3xf32>
    %17 = vector.broadcast %15 : vector<1x3xf32> to vector<3x3xf32>
    %18 = arith.mulf %16, %17 : vector<3x3xf32>
    %19 = arith.addf %13, %18 : vector<3x3xf32>
    %20 = arith.addf %19, %1 : vector<3x3xf32>
    %21 = vector.extract_strided_slice %1 {offsets = [0, 0], sizes = [3, 1], strides = [1, 1]} : vector<3x3xf32> to vector<3x1xf32>
    %22 = vector.extract_strided_slice %20 {offsets = [0, 0], sizes = [1, 3], strides = [1, 1]} : vector<3x3xf32> to vector<1x3xf32>
    %23 = vector.broadcast %21 : vector<3x1xf32> to vector<3x3xf32>
    %24 = vector.broadcast %22 : vector<1x3xf32> to vector<3x3xf32>
    %25 = arith.mulf %23, %24 : vector<3x3xf32>
    %26 = vector.extract_strided_slice %1 {offsets = [0, 1], sizes = [3, 1], strides = [1, 1]} : vector<3x3xf32> to vector<3x1xf32>
    %27 = vector.extract_strided_slice %20 {offsets = [1, 0], sizes = [1, 3], strides = [1, 1]} : vector<3x3xf32> to vector<1x3xf32>
    %28 = vector.broadcast %26 : vector<3x1xf32> to vector<3x3xf32>
    %29 = vector.broadcast %27 : vector<1x3xf32> to vector<3x3xf32>
    %30 = arith.mulf %28, %29 : vector<3x3xf32>
    %31 = arith.addf %25, %30 : vector<3x3xf32>
    %32 = vector.extract_strided_slice %1 {offsets = [0, 2], sizes = [3, 1], strides = [1, 1]} : vector<3x3xf32> to vector<3x1xf32>
    %33 = vector.extract_strided_slice %20 {offsets = [2, 0], sizes = [1, 3], strides = [1, 1]} : vector<3x3xf32> to vector<1x3xf32>
    %34 = vector.broadcast %32 : vector<3x1xf32> to vector<3x3xf32>
    %35 = vector.broadcast %33 : vector<1x3xf32> to vector<3x3xf32>
    %36 = arith.mulf %34, %35 : vector<3x3xf32>
    %37 = arith.addf %31, %36 : vector<3x3xf32>
    %38 = arith.addf %37, %2 : vector<3x3xf32>
    %c0_5 = arith.constant 0 : index
    %c0_6 = arith.constant 0 : index
    %39 = vector.load %arg3[%c0_5, %c0_6] : memref<3x3xf32, #tpu.memory_space<vmem>>, vector<3x3xf32>
    tpu.vector_store %arg3[%c0_5, %c0_6], %38 {strides = array<i32>} : memref<3x3xf32, #tpu.memory_space<vmem>>, vector<3x3xf32>,
    return
  }
}

</mosaic_0001>

<llo_original>
// kernel: tpu_custom_call.1
$region0: #{tpu_custom_call.1}
  #allocation0 [shape = 'u32[]', space=smem, size = 0x4, offset = 0x4, fixed_abs, tag = 'smem constant byte address 0x4 - core index']
  #allocation1 [shape = 'u32[144,128]{1,0:T(1,128)}', space=vmem, size = 0x12000, scoped, tag = 'internal scratch']
  %s0 = inlined_call_operand.hbm [shape: f32[3,3], index: 0, kind: input, shape index: {}]
  %s1 = inlined_call_operand.hbm [shape: f32[3,3], index: 1, kind: input, shape index: {}]
  %s2 = inlined_call_operand.vmem [shape: f32[3,3], index: 2, kind: input, shape index: {}]
  %s3 = inlined_call_operand.hbm [shape: f32[3,3], index: 3, kind: output, shape index: {}]
  %s4 = sld [smem:[#allocation0]]
  $region30: #{tpu_custom_call.1} parent=0
    _
  %s6 = ssub.s32 1, %s4
  %s7 = scalar_select 0, %s6, %s4
  $region1: #{tpu_custom_call.1} parent=0
    #allocation2 [shape = 'u8[2048]{0}', space=vmem, size = 0x800, scoped, tag = 'input window, operand 0, single buffered']
    #allocation3 [shape = 's32[1]{0}', space=sflag, size = 0x4, scoped, tag = 'scoped memory for tpu_custom_call.1']
    #allocation4 [shape = 's32[1]{0}', space=sflag, size = 0x4, scoped, tag = 'scoped memory for tpu_custom_call.1']
    #allocation5 [shape = 'u8[2048]{0}', space=vmem, size = 0x800, scoped, tag = 'input window, operand 1, single buffered']
    #allocation6 [shape = 's32[1]{0}', space=sflag, size = 0x4, scoped, tag = 'scoped memory for tpu_custom_call.1']
    #allocation7 [shape = 'u8[2048]{0}', space=vmem, size = 0x800, scoped, tag = 'output window, operand 0, single buffered']
    %8 = vsyncpa [#allocation3], 0
    %9 = vsyncpa [#allocation6], 0
    %10 = vsyncpa [#allocation4], 0
    // Predicated region
    $region2: #{tpu_custom_call.1} parent=1 // pred_check
      _
    $region3: #{tpu_custom_call.1} parent=1 // pred_check_branch
      %12 = sbr.rel (0) target = $region5
    $region4: #{tpu_custom_call.1} parent=1 // pred_region
      %s14 = ssub.s32 64, 64
      %15 = vsyncadd [#allocation3], %s14
      %s17 = sshll.u32 [#allocation2], 4
      %s18 = int_to_ptr.vmem [resolvable:$true] %s17
      %20 = dma.hbm_to_vmem [thread:$0]  %s0, 64, %s18, [#allocation3]
    $region5: #{tpu_custom_call.1} parent=1 // pred_fallthru
      _
    // Predicated region
    $region6: #{tpu_custom_call.1} parent=1 // pred_check
      _
    $region7: #{tpu_custom_call.1} parent=1 // pred_check_branch
      %22 = sbr.rel (0) target = $region9
    $region8: #{tpu_custom_call.1} parent=1 // pred_region
      %s24 = ssub.s32 64, 64
      %25 = vsyncadd [#allocation6], %s24
      %s27 = sshll.u32 [#allocation5], 4
      %s28 = int_to_ptr.vmem [resolvable:$true] %s27
      %30 = dma.hbm_to_vmem [thread:$0]  %s1, 64, %s28, [#allocation6]
    $region9: #{tpu_custom_call.1} parent=1 // pred_fallthru
      _
    // Predicated region
    $region10: #{tpu_custom_call.1} parent=1 // pred_check
      _
    $region11: #{tpu_custom_call.1} parent=1 // pred_check_branch
      %32 = sbr.rel (0) target = $region13
    $region12: #{tpu_custom_call.1} parent=1 // pred_region
      _
    $region13: #{tpu_custom_call.1} parent=1 // pred_fallthru
      _
    // Predicated region
    $region14: #{tpu_custom_call.1} parent=1 // pred_check
      _
    $region15: #{tpu_custom_call.1} parent=1 // pred_check_branch
      %34 = sbr.rel (0) target = $region17
    $region16: #{tpu_custom_call.1} parent=1 // pred_region
      %35 = dma.done [#allocation3], 64
    $region17: #{tpu_custom_call.1} parent=1 // pred_fallthru
      _
    // Predicated region
    $region18: #{tpu_custom_call.1} parent=1 // pred_check
      _
    $region19: #{tpu_custom_call.1} parent=1 // pred_check_branch
      %37 = sbr.rel (0) target = $region21
    $region20: #{tpu_custom_call.1} parent=1 // pred_region
      %38 = dma.done [#allocation6], 64
    $region21: #{tpu_custom_call.1} parent=1 // pred_fallthru
      _
    %v39 = vld [vmem:[#allocation2] sm:$0x7]
    %v40 = vld [vmem:[#allocation5] sm:$0x7]
    %v41 = vld [vmem:[%s2] sm:$0x7]
    %43 = vset.pattern.permute.xlu0 0
    %44 = vperm.xlu0 %43, %v39
    %v45 = vpop.permute.xlu0 %44
    %v47 = vlaneseq
    %v48 = vshrl.u32 %v47, 7
    %v49 = vsub.s32 0, %v48
    %v50 = vrot.slane %v41, %v49
    %v51 = vmul.f32 %v45, %v50
    %52 = vset.pattern.permute.xlu0 1
    %53 = vperm.xlu0 %52, %v39
    %v54 = vpop.permute.xlu0 %53
    %v56 = vlaneseq
    %v57 = vshrl.u32 %v56, 7
    %v58 = vsub.s32 1, %v57
    %v59 = vrot.slane %v41, %v58
    %v60 = vmul.f32 %v54, %v59
    %v61 = vadd.f32 %v51, %v60
    %62 = vset.pattern.permute.xlu0 2
    %63 = vperm.xlu0 %62, %v39
    %v64 = vpop.permute.xlu0 %63
    %v66 = vlaneseq
    %v67 = vshrl.u32 %v66, 7
    %v68 = vsub.s32 2, %v67
    %v69 = vrot.slane %v41, %v68
    %v70 = vmul.f32 %v64, %v69
    %v71 = vadd.f32 %v61, %v70
    %v72 = vadd.f32 %v71, %v40
    %74 = vset.pattern.permute.xlu0 0
    %75 = vperm.xlu0 %74, %v40
    %v76 = vpop.permute.xlu0 %75
    %v78 = vlaneseq
    %v79 = vshrl.u32 %v78, 7
    %v80 = vsub.s32 0, %v79
    %v81 = vrot.slane %v72, %v80
    %v82 = vmul.f32 %v76, %v81
    %83 = vset.pattern.permute.xlu0 1
    %84 = vperm.xlu0 %83, %v40
    %v85 = vpop.permute.xlu0 %84
    %v87 = vlaneseq
    %v88 = vshrl.u32 %v87, 7
    %v89 = vsub.s32 1, %v88
    %v90 = vrot.slane %v72, %v89
    %v91 = vmul.f32 %v85, %v90
    %v92 = vadd.f32 %v82, %v91
    %93 = vset.pattern.permute.xlu0 2
    %94 = vperm.xlu0 %93, %v40
    %v95 = vpop.permute.xlu0 %94
    %v97 = vlaneseq
    %v98 = vshrl.u32 %v97, 7
    %v99 = vsub.s32 2, %v98
    %v100 = vrot.slane %v72, %v99
    %v101 = vmul.f32 %v95, %v100
    %v102 = vadd.f32 %v92, %v101
    %v103 = vadd.f32 %v102, %v41
    %vm104 = vcmask 18432
    %105 = vst.msk [vmem:[#allocation7] sm:$0x7] %vm104, %v103
    // Predicated region
    $region22: #{tpu_custom_call.1} parent=1 // pred_check
      _
    $region23: #{tpu_custom_call.1} parent=1 // pred_check_branch
      %107 = sbr.rel (0) target = $region25
    $region24: #{tpu_custom_call.1} parent=1 // pred_region
      %s109 = ssub.s32 64, 64
      %110 = vsyncadd [#allocation4], %s109
      %s112 = sshll.u32 [#allocation7], 4
      %s113 = int_to_ptr.vmem [resolvable:$true] %s112
      %115 = dma.vmem_to_hbm [thread:$0]  %s113, 64, %s3, [#allocation4]
    $region25: #{tpu_custom_call.1} parent=1 // pred_fallthru
      _
    // Predicated region
    $region26: #{tpu_custom_call.1} parent=1 // pred_check
      _
    $region27: #{tpu_custom_call.1} parent=1 // pred_check_branch
      %117 = sbr.rel (0) target = $region29
    $region28: #{tpu_custom_call.1} parent=1 // pred_region
      %118 = dma.done [#allocation4], 64
    $region29: #{tpu_custom_call.1} parent=1 // pred_fallthru
      _
    %119 = vsyncpa [#allocation3], 1
    %120 = vsyncpa [#allocation6], 1
    %121 = vsyncpa [#allocation4], 1

</llo_original>
